<compile_context>
chip_gen: v7x
topology: tpu7x:2x2x1
jax: 0.10.0
libtpu: 0.0.40
codegen_flags: <defaults>
</compile_context>

<pallas_src>
import jax
import jax.numpy as jnp
from jax.experimental import pallas as pl
from jax.experimental.pallas import tpu as pltpu

LANE = 128
TILE_ROWS = 4096                         # (4096, 128) f32 block = 2 MiB per input per buffer
DEFAULT_MIN_KERNEL_ELEMENTS = 1 << 16    # below this, plain jnp beats a kernel launch

MODELS_TENSOR_PREDICTIONS_KEY = "model_tensor_predictions"
GT_TENSOR_PREDICTIONS_KEY = "gt_tensor_predictions"


def _cdiv(a, b):
    return -(-a // b)


def _round_up(a, b):
    return _cdiv(a, b) * b


def _sublane_multiple(dtype):
    # f32 -> 8 sublanes, bf16/f16 -> 16, int8/fp8 -> 32 (sub-32-bit packs along sublanes).
    return max(8, 32 // max(1, jnp.dtype(dtype).itemsize))


def _num_tensorcores():
    """TensorCores available for the core-parallel grid axis (1 on v5e/v6e, 2 on v7x).

    # TODO(synk): switch to pltpu.get_tpu_info() once its per-chip core-count field
    # name is confirmed; device_kind string matching is the safe fallback for now.
    """
    try:
        kind = jax.devices()[0].device_kind.lower()
    except Exception:
        return 1
    if "v7" in kind or "tpu7" in kind:
        return 2
    return 1


# ----------------------------- Pallas kernel --------------------------------
def _make_fused_kernel(block_rows, rows, needs_mask, two_axes):
    """Kernel accumulating per-(sublane,lane) sum((p-g)^2) and sum(|p-g|) in one pass."""
    full_tiles = rows // block_rows  # tiles that need no tail mask (static)

    def kernel(p_ref, g_ref, out_ref, acc_ref):
        if two_axes:
            c = pl.program_id(0)            # core-parallel axis (v7x)
            i = pl.program_id(1)            # sequential tile axis (reduction)
            nt = pl.num_programs(1)
        else:
            c = 0
            i = pl.program_id(0)
            nt = pl.num_programs(0)

        @pl.when(i == 0)
        def _():
            acc_ref[...] = jnp.zeros_like(acc_ref)

        d = p_ref[...].astype(jnp.float32) - g_ref[...].astype(jnp.float32)

        def accumulate(dd):
            # (block_rows, 128) -> (block_rows//8, 8, 128) aligns with (8,128) tiles:
            # no relayout.  Leading-axis sum = full-vreg VALU adds; the cross-sublane
            # (XLU) reduce is deferred to the tiny JAX glue after the kernel.
            dd3 = dd.reshape(block_rows // 8, 8, LANE)
            acc_ref[0, :, :] += jnp.sum(dd3 * dd3, axis=0)
            acc_ref[1, :, :] += jnp.sum(jnp.abs(dd3), axis=0)

        if needs_mask:
            tile_idx = c * nt + i           # global tile index

            @pl.when(tile_idx >= full_tiles)
            def _():
                # Only the overhanging / phantom tiles pay for the mask.
                row0 = tile_idx * block_rows
                row_ids = row0 + jax.lax.broadcasted_iota(
                    jnp.int32, (block_rows, LANE), 0)
                accumulate(jnp.where(row_ids < rows, d, 0.0))

            @pl.when(tile_idx < full_tiles)
            def _():
                accumulate(d)
        else:
            accumulate(d)

        @pl.when(i == nt - 1)
        def _():
            out_ref[...] = acc_ref[...].reshape(1, 2, 8, LANE)

    return kernel


def _fused_abs_sq_sums(pred, gt, *, min_kernel_elements=DEFAULT_MIN_KERNEL_ELEMENTS,
                       tile_rows=TILE_ROWS):
    """Returns (sum((pred-gt)^2), sum(|pred-gt|)) over all elements.

    One HBM pass for both reductions; the reduction itself runs in Pallas.
    """
    assert pred.shape == gt.shape, (pred.shape, gt.shape)
    n = int(pred.size)
    if n == 0:
        z = jnp.float32(0.0)
        return z, z

    rows = n // LANE  # number of full 128-element rows

    # Small-input fast path: kernel launch overhead would dominate.
    if n < min_kernel_elements or rows == 0:
        d = pred.astype(jnp.float32).reshape(-1) - gt.astype(jnp.float32).reshape(-1)
        return jnp.sum(d * d), jnp.sum(jnp.abs(d))

    flat_p = pred.reshape(-1)   # native dtype; kernel casts per tile
    flat_g = gt.reshape(-1)
    n_aligned = rows * LANE

    # Ragged tail (<=127 elements): reduce it with plain jnp instead of padding the
    # whole array (a pad would read+write the full tensors in HBM before the kernel).
    tail_sq = jnp.float32(0.0)
    tail_abs = jnp.float32(0.0)
    if n_aligned < n:
        tp = flat_p[n_aligned:].astype(jnp.float32)
        tg = flat_g[n_aligned:].astype(jnp.float32)
        dt = tp - tg
        tail_sq = jnp.sum(dt * dt)
        tail_abs = jnp.sum(jnp.abs(dt))
        flat_p = flat_p[:n_aligned]
        flat_g = flat_g[:n_aligned]

    p2 = flat_p.reshape(rows, LANE)
    g2 = flat_g.reshape(rows, LANE)

    # Round the block to the dtype's sublane packing (8 f32 / 16 bf16 / 32 int8).
    sub = max(_sublane_multiple(pred.dtype), _sublane_multiple(gt.dtype))
    block_rows = min(_round_up(tile_rows, sub), _round_up(rows, sub))
    total_tiles = _cdiv(rows, block_rows)

    ncores = _num_tensorcores()
    if ncores > total_tiles:
        ncores = 1
    tiles_per_core = _cdiv(total_tiles, ncores)
    padded_tiles = tiles_per_core * ncores          # may exceed total_tiles (phantom tiles)
    needs_mask = (padded_tiles * block_rows) != rows
    two_axes = ncores > 1

    kernel = _make_fused_kernel(block_rows, rows, needs_mask, two_axes)

    if two_axes:
        # Core-parallel split across the 2 TensorCores; phantom tiles (uneven split)
        # are clamped onto valid data in the index_map and zeroed by the in-kernel mask.
        def in_index_map(c, i):
            t = c * tiles_per_core + i
            return (jnp.minimum(t, total_tiles - 1), 0)

        def out_index_map(c, i):
            return (c, 0, 0, 0)

        grid = (ncores, tiles_per_core)
        dim_sem = (pltpu.CORE_PARALLEL, pltpu.ARBITRARY)
    else:
        def in_index_map(i):
            return (i, 0)

        def out_index_map(i):
            return (0, 0, 0, 0)

        grid = (total_tiles,)
        dim_sem = (pltpu.ARBITRARY,)

    in_bytes = n_aligned * (jnp.dtype(pred.dtype).itemsize + jnp.dtype(gt.dtype).itemsize)
    cost = pl.CostEstimate(
        flops=5 * n_aligned,
        transcendentals=0,
        bytes_accessed=in_bytes + ncores * 2 * 8 * LANE * 4,
    )

    out = pl.pallas_call(
        kernel,
        out_shape=jax.ShapeDtypeStruct((ncores, 2, 8, LANE), jnp.float32),
        grid_spec=pltpu.PrefetchScalarGridSpec(
            num_scalar_prefetch=0,
            grid=grid,
            in_specs=[
                pl.BlockSpec((block_rows, LANE), in_index_map),
                pl.BlockSpec((block_rows, LANE), in_index_map),
            ],
            out_specs=pl.BlockSpec((1, 2, 8, LANE), out_index_map),
            scratch_shapes=[pltpu.VMEM((2, 8, LANE), jnp.float32)],
        ),
        compiler_params=pltpu.CompilerParams(dimension_semantics=dim_sem),
        cost_estimate=cost,
    )(p2, g2)

    # Final tiny reduction over (ncores, 8, 128) in JAX glue.
    sum_sq = jnp.sum(out[:, 0, :, :]) + tail_sq
    sum_abs = jnp.sum(out[:, 1, :, :]) + tail_abs
    return sum_sq, sum_abs


# --------------------------- Loss module mirrors -----------------------------
class LossComponent:
    """Mirror of the abstract PyTorch LossComponent API."""

    def forward(self, inputs):
        raise NotImplementedError

    def __call__(self, inputs):
        return self.forward(inputs=inputs)

    def update(self, params):
        for key in params:
            if hasattr(self, key):
                setattr(self, key, params[key])


class MSELossComponent(LossComponent):
    """mse_loss(pred, gt) with 'mean' reduction; reduction done in Pallas."""

    def __init__(self, min_kernel_elements=DEFAULT_MIN_KERNEL_ELEMENTS):
        self.min_kernel_elements = min_kernel_elements

    def forward(self, inputs):
        pred = inputs[MODELS_TENSOR_PREDICTIONS_KEY]
        gt = inputs[GT_TENSOR_PREDICTIONS_KEY]
        sum_sq, _ = _fused_abs_sq_sums(
            pred, gt, min_kernel_elements=self.min_kernel_elements)
        return sum_sq / jnp.float32(pred.size)


class L1LossComponent(LossComponent):
    """l1_loss(pred, gt) with 'mean' reduction; reduction done in Pallas."""

    def __init__(self, min_kernel_elements=DEFAULT_MIN_KERNEL_ELEMENTS):
        self.min_kernel_elements = min_kernel_elements

    def forward(self, inputs):
        pred = inputs[MODELS_TENSOR_PREDICTIONS_KEY]
        gt = inputs[GT_TENSOR_PREDICTIONS_KEY]
        _, sum_abs = _fused_abs_sq_sums(
            pred, gt, min_kernel_elements=self.min_kernel_elements)
        return sum_abs / jnp.float32(pred.size)


class CompoundedLoss(LossComponent):
    """Weighted sum of sub-losses: loss = sum_i w_i * loss_i(inputs).

    When every sub-loss is an MSE/L1 component over the same pred/gt pair, both
    reductions are fused into a single Pallas pass (pred/gt streamed from HBM once);
    weights are applied in scalar glue.
    """

    def __init__(self, losses, losses_weights=None,
                 min_kernel_elements=DEFAULT_MIN_KERNEL_ELEMENTS):
        if losses_weights is not None:
            assert len(losses) == len(losses_weights), (
                "losses_weights should either specify a weight of type float for "
                "each loss in losses, or be left as None. Currently there are"
                f"{len(losses)} and {len(losses_weights)} weights."
            )
            self._losses_weights = losses_weights
        else:
            self._losses_weights = [1.0 for _ in range(len(losses))]
        self._losses = losses
        self.min_kernel_elements = min_kernel_elements

    def forward(self, inputs):
        fusable = len(self._losses) > 0 and all(
            isinstance(l, (MSELossComponent, L1LossComponent)) for l in self._losses)
        if fusable:
            pred = inputs[MODELS_TENSOR_PREDICTIONS_KEY]
            gt = inputs[GT_TENSOR_PREDICTIONS_KEY]
            sum_sq, sum_abs = _fused_abs_sq_sums(
                pred, gt, min_kernel_elements=self.min_kernel_elements)
            inv_n = 1.0 / float(pred.size)
            loss = jnp.float32(0.0)
            for w, l in zip(self._losses_weights, self._losses):
                per_sum = sum_sq if isinstance(l, MSELossComponent) else sum_abs
                loss = loss + w * per_sum * inv_n
            return loss

        # Generic (unfused) path: exact PyTorch CompoundedLoss semantics.
        loss = sum(self._losses_weights[i] * self._losses[i](inputs)
                   for i in range(len(self._losses)))
        return loss


# --------------------------------- main --------------------------------------
if __name__ == "__main__":
    key = jax.random.PRNGKey(0)
    k1, k2, k3, k4, k5, k6 = jax.random.split(key, 6)

    # Small NCHW tensors (batch=2, channels=4, spatial=16x16).
    pred = jax.random.normal(k1, (2, 4, 16, 16), dtype=jnp.float32)
    gt = jax.random.normal(k2, (2, 4, 16, 16), dtype=jnp.float32)
    inputs = {MODELS_TENSOR_PREDICTIONS_KEY: pred, GT_TENSOR_PREDICTIONS_KEY: gt}

    # min_kernel_elements=0 forces the Pallas kernel path even at demo size.
    compound = CompoundedLoss(
        losses=[MSELossComponent(min_kernel_elements=0),
                L1LossComponent(min_kernel_elements=0)],
        losses_weights=[0.7, 0.3],
        min_kernel_elements=0,
    )

    loss = jax.block_until_ready(compound(inputs))
    d = pred - gt
    ref = 0.7 * jnp.mean(d * d) + 0.3 * jnp.mean(jnp.abs(d))
    assert jnp.allclose(loss, ref, rtol=1e-5, atol=1e-6), (loss, ref)

    # Ragged case (element count not a multiple of 128): exercises the in-kernel
    # overhang mask + jnp tail reduction (no full-array pad copy).
    pred2 = jax.random.normal(k3, (3, 5, 24, 24), dtype=jnp.float32)
    gt2 = jax.random.normal(k4, (3, 5, 24, 24), dtype=jnp.float32)
    inputs2 = {MODELS_TENSOR_PREDICTIONS_KEY: pred2, GT_TENSOR_PREDICTIONS_KEY: gt2}
    loss2 = jax.block_until_ready(compound(inputs2))
    d2 = pred2 - gt2
    ref2 = 0.7 * jnp.mean(d2 * d2) + 0.3 * jnp.mean(jnp.abs(d2))
    assert jnp.allclose(loss2, ref2, rtol=1e-5, atol=1e-6), (loss2, ref2)

    # Multi-tile accumulation path (small tile_rows override keeps the demo small);
    # on a 2-TensorCore chip this also exercises the core-parallel split.
    pred3 = jax.random.normal(k5, (2, 4, 32, 32), dtype=jnp.float32)
    gt3 = jax.random.normal(k6, (2, 4, 32, 32), dtype=jnp.float32)
    ssq, sab = _fused_abs_sq_sums(pred3, gt3, min_kernel_elements=0, tile_rows=8)
    ssq = jax.block_until_ready(ssq)
    d3 = (pred3 - gt3).astype(jnp.float32)
    assert jnp.allclose(ssq, jnp.sum(d3 * d3), rtol=1e-5, atol=1e-4), (ssq,)
    assert jnp.allclose(sab, jnp.sum(jnp.abs(d3)), rtol=1e-5, atol=1e-4), (sab,)

    print("KERNEL_OK")
</pallas_src>

<mosaic_0001>
module attributes {stable_mosaic.version = 11 : i64} {
  func.func @kernel(%arg0: i32, %arg1: memref<16x128xf32, #tpu.memory_space<vmem>>, %arg2: memref<16x128xf32, #tpu.memory_space<vmem>>, %arg3: memref<1x2x8x128xf32, #tpu.memory_space<vmem>>, %arg4: memref<2x8x128xf32, #tpu.memory_space<vmem>>) attributes {dimension_semantics = [#tpu.dimension_semantics<arbitrary>], iteration_bounds = array<i64: 1>, scalar_prefetch = 0 : i64, scratch_operands = 1 : i64, tpu.core_type = #tpu.core_type<tc>, window_params = [{transform_indices = @transform_0, window_bounds = array<i64: 16, 128>}, {transform_indices = @transform_1, window_bounds = array<i64: 16, 128>}, {pipeline_mode = #tpu.pipeline_mode<synchronous>, transform_indices = @transform_2, window_bounds = array<i64: 1, 2, 8, 128>}]} {
    %c0_i32 = arith.constant 0 : i32
    %0 = arith.cmpi eq, %arg0, %c0_i32 : i32
    %1 = arith.extui %0 : i1 to i32
    %c0_i32_0 = arith.constant 0 : i32
    %2 = arith.cmpi ne, %1, %c0_i32_0 : i32
    scf.if %2 {
      %cst_18 = arith.constant 0.000000e+00 : f32
      %26 = vector.broadcast %cst_18 : f32 to vector<2x8x128xf32>
      %c0_19 = arith.constant 0 : index
      %c0_20 = arith.constant 0 : index
      %c0_21 = arith.constant 0 : index
      %27 = vector.load %arg4[%c0_19, %c0_20, %c0_21] : memref<2x8x128xf32, #tpu.memory_space<vmem>>, vector<2x8x128xf32>
      tpu.vector_store %arg4[%c0_19, %c0_20, %c0_21], %26 {strides = array<i32>} : memref<2x8x128xf32, #tpu.memory_space<vmem>>, vector<2x8x128xf32>,
    } else {
    }
    %c0 = arith.constant 0 : index
    %c0_1 = arith.constant 0 : index
    %3 = vector.load %arg1[%c0, %c0_1] : memref<16x128xf32, #tpu.memory_space<vmem>>, vector<16x128xf32>
    %c0_2 = arith.constant 0 : index
    %c0_3 = arith.constant 0 : index
    %4 = vector.load %arg2[%c0_2, %c0_3] : memref<16x128xf32, #tpu.memory_space<vmem>>, vector<16x128xf32>
    %5 = arith.subf %3, %4 : vector<16x128xf32>
    %6 = vector.shape_cast %5 : vector<16x128xf32> to vector<2x8x128xf32>
    %c0_4 = arith.constant 0 : index
    %c0_5 = arith.constant 0 : index
    %c0_6 = arith.constant 0 : index
    %7 = vector.load %arg4[%c0_4, %c0_5, %c0_6] : memref<2x8x128xf32, #tpu.memory_space<vmem>>, vector<1x8x128xf32>
    %8 = vector.shape_cast %7 : vector<1x8x128xf32> to vector<8x128xf32>
    %9 = arith.mulf %6, %6 : vector<2x8x128xf32>
    %cst = arith.constant dense<0.000000e+00> : vector<8x128xf32>
    %10 = vector.multi_reduction <add>, %9, %cst [0] : vector<2x8x128xf32> to vector<8x128xf32>
    %11 = arith.addf %8, %10 : vector<8x128xf32>
    %c0_7 = arith.constant 0 : index
    %c0_8 = arith.constant 0 : index
    %c0_9 = arith.constant 0 : index
    %12 = vector.load %arg4[%c0_7, %c0_8, %c0_9] : memref<2x8x128xf32, #tpu.memory_space<vmem>>, vector<1x8x128xf32>
    %13 = vector.shape_cast %12 : vector<1x8x128xf32> to vector<8x128xf32>
    %14 = vector.shape_cast %11 : vector<8x128xf32> to vector<1x8x128xf32>
    tpu.vector_store %arg4[%c0_7, %c0_8, %c0_9], %14 {strides = array<i32>} : memref<2x8x128xf32, #tpu.memory_space<vmem>>, vector<1x8x128xf32>,
    %c1 = arith.constant 1 : index
    %c0_10 = arith.constant 0 : index
    %c0_11 = arith.constant 0 : index
    %15 = vector.load %arg4[%c1, %c0_10, %c0_11] : memref<2x8x128xf32, #tpu.memory_space<vmem>>, vector<1x8x128xf32>
    %16 = vector.shape_cast %15 : vector<1x8x128xf32> to vector<8x128xf32>
    %17 = math.absf %6 : vector<2x8x128xf32>
    %cst_12 = arith.constant dense<0.000000e+00> : vector<8x128xf32>
    %18 = vector.multi_reduction <add>, %17, %cst_12 [0] : vector<2x8x128xf32> to vector<8x128xf32>
    %19 = arith.addf %16, %18 : vector<8x128xf32>
    %c1_13 = arith.constant 1 : index
    %c0_14 = arith.constant 0 : index
    %c0_15 = arith.constant 0 : index
    %20 = vector.load %arg4[%c1_13, %c0_14, %c0_15] : memref<2x8x128xf32, #tpu.memory_space<vmem>>, vector<1x8x128xf32>
    %21 = vector.shape_cast %20 : vector<1x8x128xf32> to vector<8x128xf32>
    %22 = vector.shape_cast %19 : vector<8x128xf32> to vector<1x8x128xf32>
    tpu.vector_store %arg4[%c1_13, %c0_14, %c0_15], %22 {strides = array<i32>} : memref<2x8x128xf32, #tpu.memory_space<vmem>>, vector<1x8x128xf32>,
    %c0_i32_16 = arith.constant 0 : i32
    %23 = arith.cmpi eq, %arg0, %c0_i32_16 : i32
    %24 = arith.extui %23 : i1 to i32
    %c0_i32_17 = arith.constant 0 : i32
    %25 = arith.cmpi ne, %24, %c0_i32_17 : i32
    scf.if %25 {
      %c0_18 = arith.constant 0 : index
      %c0_19 = arith.constant 0 : index
      %c0_20 = arith.constant 0 : index
      %26 = vector.load %arg4[%c0_18, %c0_19, %c0_20] : memref<2x8x128xf32, #tpu.memory_space<vmem>>, vector<2x8x128xf32>
      %27 = vector.shape_cast %26 : vector<2x8x128xf32> to vector<1x2x8x128xf32>
      %c0_21 = arith.constant 0 : index
      %c0_22 = arith.constant 0 : index
      %c0_23 = arith.constant 0 : index
      %c0_24 = arith.constant 0 : index
      %28 = vector.load %arg3[%c0_21, %c0_22, %c0_23, %c0_24] : memref<1x2x8x128xf32, #tpu.memory_space<vmem>>, vector<1x2x8x128xf32>
      tpu.vector_store %arg3[%c0_21, %c0_22, %c0_23, %c0_24], %27 {strides = array<i32>} : memref<1x2x8x128xf32, #tpu.memory_space<vmem>>, vector<1x2x8x128xf32>,
    } else {
    }
    return
  }
  func.func @transform_0(%arg0: i32) -> (i32, i32) {
    %c0_i32 = arith.constant 0 : i32
    %c0_i32_0 = arith.constant 0 : i32
    return %arg0, %c0_i32 : i32, i32
  }
  func.func @transform_1(%arg0: i32) -> (i32, i32) {
    %c0_i32 = arith.constant 0 : i32
    %c0_i32_0 = arith.constant 0 : i32
    return %arg0, %c0_i32 : i32, i32
  }
  func.func @transform_2(%arg0: i32) -> (i32, i32, i32, i32) {
    %c0_i32 = arith.constant 0 : i32
    %c0_i32_0 = arith.constant 0 : i32
    %c0_i32_1 = arith.constant 0 : i32
    %c0_i32_2 = arith.constant 0 : i32
    %c0_i32_3 = arith.constant 0 : i32
    return %c0_i32, %c0_i32_0, %c0_i32_1, %c0_i32_2 : i32, i32, i32, i32
  }
}

</mosaic_0001>

<llo_original>
// kernel: tpu_custom_call.1
$region0: #{tpu_custom_call.1}
  #allocation0 [shape = 'u32[]', space=smem, size = 0x4, offset = 0x4, fixed_abs, tag = 'smem constant byte address 0x4 - core index']
  #allocation1 [shape = 'u32[144,128]{1,0:T(1,128)}', space=vmem, size = 0x12000, scoped, tag = 'internal scratch']
  #allocation2 [shape = 'f32[2,8,128]{2,1,0:T(8,128)}', space=vmem, size = 0x2000, scoped, tag = 'scratch operand']
  %s0 = inlined_call_operand.hbm [shape: f32[16,128], index: 0, kind: input, shape index: {}]
  %s1 = inlined_call_operand.hbm [shape: f32[16,128], index: 1, kind: input, shape index: {}]
  %s2 = inlined_call_operand.hbm [shape: f32[1,2,8,128], index: 2, kind: output, shape index: {}]
  %s3 = sld [smem:[#allocation0]]
  $region34: #{tpu_custom_call.1} parent=0
    _
  %s5 = ssub.s32 1, %s3
  %s6 = scalar_select 0, %s5, %s3
  $region1: #{tpu_custom_call.1} parent=0
    #allocation3 [shape = 'u8[8192]{0}', space=vmem, size = 0x2000, scoped, tag = 'input window, operand 0, single buffered']
    #allocation4 [shape = 's32[1]{0}', space=sflag, size = 0x4, scoped, tag = 'scoped memory for tpu_custom_call.1']
    #allocation5 [shape = 's32[1]{0}', space=sflag, size = 0x4, scoped, tag = 'scoped memory for tpu_custom_call.1']
    #allocation6 [shape = 'u8[8192]{0}', space=vmem, size = 0x2000, scoped, tag = 'input window, operand 1, single buffered']
    #allocation7 [shape = 's32[1]{0}', space=sflag, size = 0x4, scoped, tag = 'scoped memory for tpu_custom_call.1']
    #allocation8 [shape = 'u8[8192]{0}', space=vmem, size = 0x2000, scoped, tag = 'output window, operand 0, single buffered']
    %7 = vsyncpa [#allocation4], 0
    %8 = vsyncpa [#allocation7], 0
    %9 = vsyncpa [#allocation5], 0
    // Predicated region
    $region2: #{tpu_custom_call.1} parent=1 // pred_check
      _
    $region3: #{tpu_custom_call.1} parent=1 // pred_check_branch
      %11 = sbr.rel (0) target = $region5
    $region4: #{tpu_custom_call.1} parent=1 // pred_region
      %s13 = ssub.s32 256, 256
      %14 = vsyncadd [#allocation4], %s13
      %s15 = sshll.u32 [#allocation3], 4
      %s16 = int_to_ptr.vmem [resolvable:$true] %s15
      %21 = dma.hbm_to_vmem [thread:$0]  %s0, 256, %s16, [#allocation4], 128, 128, 8
    $region5: #{tpu_custom_call.1} parent=1 // pred_fallthru
      _
    // Predicated region
    $region6: #{tpu_custom_call.1} parent=1 // pred_check
      _
    $region7: #{tpu_custom_call.1} parent=1 // pred_check_branch
      %23 = sbr.rel (0) target = $region9
    $region8: #{tpu_custom_call.1} parent=1 // pred_region
      %s25 = ssub.s32 256, 256
      %26 = vsyncadd [#allocation7], %s25
      %s27 = sshll.u32 [#allocation6], 4
      %s28 = int_to_ptr.vmem [resolvable:$true] %s27
      %33 = dma.hbm_to_vmem [thread:$0]  %s1, 256, %s28, [#allocation7], 128, 128, 8
    $region9: #{tpu_custom_call.1} parent=1 // pred_fallthru
      _
    // Predicated region
    $region10: #{tpu_custom_call.1} parent=1 // pred_check
      _
    $region11: #{tpu_custom_call.1} parent=1 // pred_check_branch
      %35 = sbr.rel (0) target = $region13
    $region12: #{tpu_custom_call.1} parent=1 // pred_region
      %36 = dma.done [#allocation4], 256
    $region13: #{tpu_custom_call.1} parent=1 // pred_fallthru
      _
    // Predicated region
    $region14: #{tpu_custom_call.1} parent=1 // pred_check
      _
    $region15: #{tpu_custom_call.1} parent=1 // pred_check_branch
      %38 = sbr.rel (0) target = $region17
    $region16: #{tpu_custom_call.1} parent=1 // pred_region
      %39 = dma.done [#allocation7], 256
    $region17: #{tpu_custom_call.1} parent=1 // pred_fallthru
      _
    %p40 = scmp.eq.s32.totalorder 0, 0
    // Predicated region
    $region18: #{tpu_custom_call.1} parent=1 // pred_check
      %p41 = pneg %p40
    $region19: #{tpu_custom_call.1} parent=1 // pred_check_branch
      %43 = sbr.rel (%p41) target = $region21
    $region20: #{tpu_custom_call.1} parent=1 // pred_region
      %44 = vst [vmem:[#allocation2] sm:$0xff] 0.0
      %45 = vst [vmem:[#allocation2 + $0x8] sm:$0xff] 0.0
    $region21: #{tpu_custom_call.1} parent=1 // pred_fallthru
      _
    %v46 = vld [vmem:[#allocation3] sm:$0xff]
    %v47 = vld [vmem:[#allocation3 + $0x8] sm:$0xff]
    %v48 = vld [vmem:[#allocation6] sm:$0xff]
    %v49 = vld [vmem:[#allocation6 + $0x8] sm:$0xff]
    %v50 = vsub.f32 %v46, %v48
    %v51 = vsub.f32 %v47, %v49
    %v52 = vld [vmem:[#allocation2] sm:$0xff]
    %v53 = vmul.f32 %v50, %v50
    %v54 = vmul.f32 %v51, %v51
    %v55 = vadd.f32 %v53, %v54
    %v56 = vadd.f32 %v52, %v55
    %57 = vst [vmem:[#allocation2] sm:$0xff] %v56
    %s58 = scalar_lea.vmem [#allocation2], 8
    %v59 = vld [vmem:[%s58] sm:$0xff]
    %v60 = vand.u32 2147483647, %v50
    %v61 = vand.u32 2147483647, %v51
    %v62 = vadd.f32 %v60, %v61
    %v63 = vadd.f32 %v59, %v62
    %64 = vst [vmem:[%s58] sm:$0xff] %v63
    // Predicated region
    $region22: #{tpu_custom_call.1} parent=1 // pred_check
      %p65 = pneg %p40
    $region23: #{tpu_custom_call.1} parent=1 // pred_check_branch
      %67 = sbr.rel (%p65) target = $region25
    $region24: #{tpu_custom_call.1} parent=1 // pred_region
      %v68 = vld [vmem:[#allocation2] sm:$0xff]
      %v69 = vld [vmem:[#allocation2 + $0x8] sm:$0xff]
      %70 = vst [vmem:[#allocation8] sm:$0xff] %v68
      %71 = vst [vmem:[#allocation8 + $0x8] sm:$0xff] %v69
    $region25: #{tpu_custom_call.1} parent=1 // pred_fallthru
      _
    // Predicated region
    $region26: #{tpu_custom_call.1} parent=1 // pred_check
      _
    $region27: #{tpu_custom_call.1} parent=1 // pred_check_branch
      %73 = sbr.rel (0) target = $region29
    $region28: #{tpu_custom_call.1} parent=1 // pred_region
      %s75 = ssub.s32 256, 256
      %76 = vsyncadd [#allocation5], %s75
      %s77 = sshll.u32 [#allocation8], 4
      %s78 = int_to_ptr.vmem [resolvable:$true] %s77
      %83 = dma.vmem_to_hbm [thread:$0]  %s78, 256, %s2, [#allocation5], 128, 128, 8
    $region29: #{tpu_custom_call.1} parent=1 // pred_fallthru
      _
    // Predicated region
    $region30: #{tpu_custom_call.1} parent=1 // pred_check
      _
    $region31: #{tpu_custom_call.1} parent=1 // pred_check_branch
      %85 = sbr.rel (0) target = $region33
    $region32: #{tpu_custom_call.1} parent=1 // pred_region
      %86 = dma.done [#allocation5], 256
    $region33: #{tpu_custom_call.1} parent=1 // pred_fallthru
      _
    %87 = vsyncpa [#allocation4], 1
    %88 = vsyncpa [#allocation7], 1
    %89 = vsyncpa [#allocation5], 1

</llo_original>
